<compile_context>
chip_gen: v5e
topology: v5e:2x2
jax: 0.10.0
libtpu: 0.0.40
codegen_flags: <defaults>
</compile_context>

<pallas_src>
import jax
import jax.numpy as jnp
from jax.experimental import pallas as pl
from jax.experimental.pallas import tpu as pltpu


def _round_up(x, m):
    return ((x + m - 1) // m) * m


def _mine_kernel(z_ref, s_ref, w1_ref, b1_ref, w2_ref, b2_ref,
                 w3_ref, b3_ref, o_ref):
    # z_ref/s_ref: (TB, L) bf16      w1: (2L, H) bf16   b1: (1, H) f32
    # w2: (H, H) bf16  b2: (1, H) f32
    # w3: (1, H) f32   b3: (1, 1) f32
    # o_ref: (TB, 1) f32

    # Fused concat: build the (TB, 2L) LHS in-registers (lane concat of two
    # sub-128-lane pieces), then a single K=2L MXU matmul with f32 accumulation.
    x = jnp.concatenate([z_ref[...], s_ref[...]], axis=-1)
    h = jnp.dot(x, w1_ref[...], preferred_element_type=jnp.float32)
    h = h + b1_ref[...]
    h = jnp.maximum(h, 0.2 * h)          # LeakyReLU(0.2), f32 on VPU

    # Layer 2: bf16 MXU, f32 accumulation.
    h = jnp.dot(h.astype(jnp.bfloat16), w2_ref[...],
                preferred_element_type=jnp.float32) + b2_ref[...]
    h = jnp.maximum(h, 0.2 * h)

    # Output layer (H -> 1): VPU multiply + lane reduction, f32 throughout.
    t = jnp.sum(h * w3_ref[...], axis=-1, keepdims=True) + b3_ref[...]
    o_ref[...] = jnp.clip(t, -50.0, 50.0).astype(o_ref.dtype)


def _choose_tile(B, block_b):
    """Batch tile: multiple of 16 (bf16 sublane packing), aims for >=8 grid
    steps on large batches (v7x megacore / pipelining), capped by block_b."""
    target = _round_up(max(pl.cdiv(B, 8), 16), 128)
    tb = min(block_b, target)
    tb = max(16, _round_up(tb, 16))
    tb = min(tb, _round_up(B, 16))       # never bigger than the padded batch
    return tb


def mine_forward(z, s, params, *, block_b=4096):
    """z, s: (B, latent_dim) float32. Returns T: (B, 1) float32."""
    w1, b1, w2, b2, w3, b3 = params
    B, L = z.shape
    H = w1.shape[1]

    # One-time casts / reshapes (tiny vs. batch traffic).
    zb = z.astype(jnp.bfloat16)
    sb = s.astype(jnp.bfloat16)
    w1b = w1.astype(jnp.bfloat16)        # (2L, H)
    w2b = w2.astype(jnp.bfloat16)        # (H, H)
    w3r = w3.reshape(1, H).astype(jnp.float32)
    b1 = b1.reshape(1, H).astype(jnp.float32)
    b2 = b2.reshape(1, H).astype(jnp.float32)
    b3 = b3.reshape(1, 1).astype(jnp.float32)

    TB = _choose_tile(B, block_b)
    Bp = _round_up(B, TB)
    if Bp != B:
        zb = jnp.pad(zb, ((0, Bp - B), (0, 0)))
        sb = jnp.pad(sb, ((0, Bp - B), (0, 0)))

    grid = (Bp // TB,)

    def row_spec(d):
        return pl.BlockSpec((TB, d), lambda i: (i, 0))

    def full_spec(a):
        return pl.BlockSpec(a.shape, lambda i: (0,) * a.ndim)

    flops = 2 * Bp * (2 * L * H + H * H + H)
    bytes_accessed = (2 * (Bp * 2 * L + 2 * L * H + H * H)   # bf16 streams
                      + 4 * (Bp + 3 * H + 1))                # f32 out + biases

    out = pl.pallas_call(
        _mine_kernel,
        out_shape=jax.ShapeDtypeStruct((Bp, 1), jnp.float32),
        grid=grid,
        in_specs=[
            row_spec(L),        # z tile (bf16)
            row_spec(L),        # s tile (bf16)
            full_spec(w1b),
            full_spec(b1),
            full_spec(w2b),
            full_spec(b2),
            full_spec(w3r),
            full_spec(b3),
        ],
        out_specs=pl.BlockSpec((TB, 1), lambda i: (i, 0)),
        compiler_params=pltpu.CompilerParams(
            dimension_semantics=("parallel",)),
        cost_estimate=pl.CostEstimate(
            flops=int(flops), transcendentals=0,
            bytes_accessed=int(bytes_accessed)),
    )(zb, sb, w1b, b1, w2b, b2, w3r, b3)

    return out[:B]


def init_params(key, latent_dim, hidden_dim):
    """Deterministic synthetic params (PyTorch-Linear-like uniform init)."""
    ks = jax.random.split(key, 6)

    def lin(kw, kb, fan_in, fan_out):
        bound = 1.0 / jnp.sqrt(fan_in)
        w = jax.random.uniform(kw, (fan_in, fan_out), jnp.float32, -bound, bound)
        b = jax.random.uniform(kb, (1, fan_out), jnp.float32, -bound, bound)
        return w, b

    w1, b1 = lin(ks[0], ks[1], latent_dim * 2, hidden_dim)
    w2, b2 = lin(ks[2], ks[3], hidden_dim, hidden_dim)
    w3, b3 = lin(ks[4], ks[5], hidden_dim, 1)
    return (w1, b1, w2, b2, w3, b3)


def mine_reference(z, s, params, *, mxu_dtype=jnp.float32):
    """Pure-JAX reference. mxu_dtype=bfloat16 mirrors the kernel's MXU casts."""
    w1, b1, w2, b2, w3, b3 = params
    c = lambda a: a.astype(mxu_dtype)
    x = jnp.concatenate([z, s], axis=1)
    h = jnp.dot(c(x), c(w1), preferred_element_type=jnp.float32) + b1
    h = jnp.where(h > 0, h, 0.2 * h)
    h = jnp.dot(c(h), c(w2), preferred_element_type=jnp.float32) + b2
    h = jnp.where(h > 0, h, 0.2 * h)
    t = h @ w3 + b3.reshape(1, 1)
    return jnp.clip(t, -50.0, 50.0)


if __name__ == "__main__":
    batch = 300          # not a multiple of the tile -> exercises padding path
    latent_dim = 16
    hidden_dim = 64

    key = jax.random.PRNGKey(0)
    kz, ks_, kp = jax.random.split(key, 3)
    z = jax.random.normal(kz, (batch, latent_dim), jnp.float32)
    s = jax.random.normal(ks_, (batch, latent_dim), jnp.float32)
    params = init_params(kp, latent_dim, hidden_dim)

    # Small tile so the test exercises a multi-step parallel grid (3 steps).
    out = jax.block_until_ready(mine_forward(z, s, params, block_b=128))
    assert out.shape == (batch, 1), out.shape

    # Default-tile path should give the same result.
    out_default = jax.block_until_ready(mine_forward(z, s, params))
    assert jnp.allclose(out, out_default, atol=1e-5, rtol=1e-5)

    # Tight check vs. a reference using the same bf16-operand / f32-acc math.
    ref_bf16 = mine_reference(z, s, params, mxu_dtype=jnp.bfloat16)
    assert jnp.allclose(out, ref_bf16, atol=1e-3, rtol=1e-3), (
        float(jnp.max(jnp.abs(out - ref_bf16))))

    # Looser check vs. the full-f32 (PyTorch-equivalent) reference.
    ref_f32 = mine_reference(z, s, params, mxu_dtype=jnp.float32)
    assert jnp.allclose(out, ref_f32, atol=5e-2, rtol=5e-2), (
        float(jnp.max(jnp.abs(out - ref_f32))))

    print("KERNEL_OK")
</pallas_src>

<mosaic_0001>
module attributes {stable_mosaic.version = 11 : i64} {
  func.func @_mine_kernel(%arg0: i32, %arg1: memref<128x16xbf16, #tpu.memory_space<vmem>>, %arg2: memref<128x16xbf16, #tpu.memory_space<vmem>>, %arg3: memref<32x64xbf16, #tpu.memory_space<vmem>>, %arg4: memref<1x64xf32, #tpu.memory_space<vmem>>, %arg5: memref<64x64xbf16, #tpu.memory_space<vmem>>, %arg6: memref<1x64xf32, #tpu.memory_space<vmem>>, %arg7: memref<1x64xf32, #tpu.memory_space<vmem>>, %arg8: memref<1x1xf32, #tpu.memory_space<vmem>>, %arg9: memref<128x1xf32, #tpu.memory_space<vmem>>) attributes {dimension_semantics = [#tpu.dimension_semantics<parallel>], iteration_bounds = array<i64: 3>, scalar_prefetch = 0 : i64, scratch_operands = 0 : i64, tpu.core_type = #tpu.core_type<tc>, window_params = [{transform_indices = @transform_0, window_bounds = array<i64: 128, 16>}, {transform_indices = @transform_1, window_bounds = array<i64: 128, 16>}, {pipeline_mode = #tpu.pipeline_mode<synchronous>, transform_indices = @transform_2, window_bounds = array<i64: 32, 64>}, {pipeline_mode = #tpu.pipeline_mode<synchronous>, transform_indices = @transform_3, window_bounds = array<i64: 1, 64>}, {pipeline_mode = #tpu.pipeline_mode<synchronous>, transform_indices = @transform_4, window_bounds = array<i64: 64, 64>}, {pipeline_mode = #tpu.pipeline_mode<synchronous>, transform_indices = @transform_5, window_bounds = array<i64: 1, 64>}, {pipeline_mode = #tpu.pipeline_mode<synchronous>, transform_indices = @transform_6, window_bounds = array<i64: 1, 64>}, {pipeline_mode = #tpu.pipeline_mode<synchronous>, transform_indices = @transform_7, window_bounds = array<i64: 1, 1>}, {transform_indices = @transform_8, window_bounds = array<i64: 128, 1>}]} {
    %c0 = arith.constant 0 : index
    %c0_0 = arith.constant 0 : index
    %0 = vector.load %arg1[%c0, %c0_0] : memref<128x16xbf16, #tpu.memory_space<vmem>>, vector<128x16xbf16>
    %c0_1 = arith.constant 0 : index
    %c0_2 = arith.constant 0 : index
    %1 = vector.load %arg2[%c0_1, %c0_2] : memref<128x16xbf16, #tpu.memory_space<vmem>>, vector<128x16xbf16>
    %2 = tpu.concatenate %0, %1 in 1 : vector<128x16xbf16>, vector<128x16xbf16> -> vector<128x32xbf16>
    %c0_3 = arith.constant 0 : index
    %c0_4 = arith.constant 0 : index
    %3 = vector.load %arg3[%c0_3, %c0_4] : memref<32x64xbf16, #tpu.memory_space<vmem>>, vector<32x64xbf16>
    %cst = arith.constant dense<0.000000e+00> : vector<128x64xf32>
    %4 = tpu.matmul %2, %3, %cst {dimension_numbers = #tpu.dot_dimension_numbers<[1], [0], [0], [1], [0, 0, 1, 1], [], []>} : vector<128x32xbf16>, vector<32x64xbf16>, vector<128x64xf32> -> vector<128x64xf32>
    %c0_5 = arith.constant 0 : index
    %c0_6 = arith.constant 0 : index
    %5 = vector.load %arg4[%c0_5, %c0_6] : memref<1x64xf32, #tpu.memory_space<vmem>>, vector<1x64xf32>
    %6 = vector.broadcast %5 : vector<1x64xf32> to vector<128x64xf32>
    %7 = arith.addf %4, %6 : vector<128x64xf32>
    %cst_7 = arith.constant 2.000000e-01 : f32
    %8 = vector.broadcast %cst_7 : f32 to vector<128x64xf32>
    %9 = arith.mulf %8, %7 : vector<128x64xf32>
    %10 = arith.maximumf %7, %9 : vector<128x64xf32>
    %11 = arith.truncf %10 : vector<128x64xf32> to vector<128x64xbf16>
    %c0_8 = arith.constant 0 : index
    %c0_9 = arith.constant 0 : index
    %12 = vector.load %arg5[%c0_8, %c0_9] : memref<64x64xbf16, #tpu.memory_space<vmem>>, vector<64x64xbf16>
    %cst_10 = arith.constant dense<0.000000e+00> : vector<128x64xf32>
    %13 = tpu.matmul %11, %12, %cst_10 {dimension_numbers = #tpu.dot_dimension_numbers<[1], [0], [0], [1], [0, 0, 1, 1], [], []>} : vector<128x64xbf16>, vector<64x64xbf16>, vector<128x64xf32> -> vector<128x64xf32>
    %c0_11 = arith.constant 0 : index
    %c0_12 = arith.constant 0 : index
    %14 = vector.load %arg6[%c0_11, %c0_12] : memref<1x64xf32, #tpu.memory_space<vmem>>, vector<1x64xf32>
    %15 = vector.broadcast %14 : vector<1x64xf32> to vector<128x64xf32>
    %16 = arith.addf %13, %15 : vector<128x64xf32>
    %cst_13 = arith.constant 2.000000e-01 : f32
    %17 = vector.broadcast %cst_13 : f32 to vector<128x64xf32>
    %18 = arith.mulf %17, %16 : vector<128x64xf32>
    %19 = arith.maximumf %16, %18 : vector<128x64xf32>
    %c0_14 = arith.constant 0 : index
    %c0_15 = arith.constant 0 : index
    %20 = vector.load %arg7[%c0_14, %c0_15] : memref<1x64xf32, #tpu.memory_space<vmem>>, vector<1x64xf32>
    %21 = vector.broadcast %20 : vector<1x64xf32> to vector<128x64xf32>
    %22 = arith.mulf %19, %21 : vector<128x64xf32>
    %cst_16 = arith.constant dense<0.000000e+00> : vector<128xf32>
    %23 = vector.multi_reduction <add>, %22, %cst_16 [1] : vector<128x64xf32> to vector<128xf32>
    %24 = vector.shape_cast %23 : vector<128xf32> to vector<128x1xf32>
    %c0_17 = arith.constant 0 : index
    %c0_18 = arith.constant 0 : index
    %25 = vector.load %arg8[%c0_17, %c0_18] : memref<1x1xf32, #tpu.memory_space<vmem>>, vector<1x1xf32>
    %26 = vector.broadcast %25 : vector<1x1xf32> to vector<128x1xf32>
    %27 = arith.addf %24, %26 : vector<128x1xf32>
    %cst_19 = arith.constant -5.000000e+01 : f32
    %cst_20 = arith.constant 5.000000e+01 : f32
    %28 = vector.broadcast %cst_19 : f32 to vector<128x1xf32>
    %29 = arith.maximumf %28, %27 : vector<128x1xf32>
    %30 = vector.broadcast %cst_20 : f32 to vector<128x1xf32>
    %31 = arith.minimumf %30, %29 : vector<128x1xf32>
    %c0_21 = arith.constant 0 : index
    %c0_22 = arith.constant 0 : index
    %32 = vector.load %arg9[%c0_21, %c0_22] : memref<128x1xf32, #tpu.memory_space<vmem>>, vector<128x1xf32>
    tpu.vector_store %arg9[%c0_21, %c0_22], %31 {strides = array<i32>} : memref<128x1xf32, #tpu.memory_space<vmem>>, vector<128x1xf32>,
    return
  }
  func.func @transform_0(%arg0: i32) -> (i32, i32) {
    %c0_i32 = arith.constant 0 : i32
    %c0_i32_0 = arith.constant 0 : i32
    return %arg0, %c0_i32 : i32, i32
  }
  func.func @transform_1(%arg0: i32) -> (i32, i32) {
    %c0_i32 = arith.constant 0 : i32
    %c0_i32_0 = arith.constant 0 : i32
    return %arg0, %c0_i32 : i32, i32
  }
  func.func @transform_2(%arg0: i32) -> (i32, i32) {
    %c0_i32 = arith.constant 0 : i32
    %c0_i32_0 = arith.constant 0 : i32
    %c0_i32_1 = arith.constant 0 : i32
    return %c0_i32, %c0_i32_0 : i32, i32
  }
  func.func @transform_3(%arg0: i32) -> (i32, i32) {
    %c0_i32 = arith.constant 0 : i32
    %c0_i32_0 = arith.constant 0 : i32
    %c0_i32_1 = arith.constant 0 : i32
    return %c0_i32, %c0_i32_0 : i32, i32
  }
  func.func @transform_4(%arg0: i32) -> (i32, i32) {
    %c0_i32 = arith.constant 0 : i32
    %c0_i32_0 = arith.constant 0 : i32
    %c0_i32_1 = arith.constant 0 : i32
    return %c0_i32, %c0_i32_0 : i32, i32
  }
  func.func @transform_5(%arg0: i32) -> (i32, i32) {
    %c0_i32 = arith.constant 0 : i32
    %c0_i32_0 = arith.constant 0 : i32
    %c0_i32_1 = arith.constant 0 : i32
    return %c0_i32, %c0_i32_0 : i32, i32
  }
  func.func @transform_6(%arg0: i32) -> (i32, i32) {
    %c0_i32 = arith.constant 0 : i32
    %c0_i32_0 = arith.constant 0 : i32
    %c0_i32_1 = arith.constant 0 : i32
    return %c0_i32, %c0_i32_0 : i32, i32
  }
  func.func @transform_7(%arg0: i32) -> (i32, i32) {
    %c0_i32 = arith.constant 0 : i32
    %c0_i32_0 = arith.constant 0 : i32
    %c0_i32_1 = arith.constant 0 : i32
    return %c0_i32, %c0_i32_0 : i32, i32
  }
  func.func @transform_8(%arg0: i32) -> (i32, i32) {
    %c0_i32 = arith.constant 0 : i32
    %c0_i32_0 = arith.constant 0 : i32
    return %arg0, %c0_i32 : i32, i32
  }
}

</mosaic_0001>

<llo_original>
// kernel: tpu_custom_call.1
$region0: #{tpu_custom_call.1}
  #allocation0 [shape = 'u32[]', space=smem, size = 0x4, offset = 0x4, fixed_abs, tag = 'smem constant byte address 0x4 - core index']
  #allocation1 [shape = 'u32[72,128]{1,0:T(1,128)}', space=vmem, size = 0x9000, scoped, tag = 'internal scratch']
  #allocation2 [shape = 'f32[1,1]{1,0:T(1,128)S(1)}', space=vmem, size = 0x200, scoped, tag = 'scoped memory for tpu_custom_call.1']
  %s0 = inlined_call_operand.vmem [shape: bf16[384,16], index: 0, kind: input, shape index: {}]
  %s1 = inlined_call_operand.vmem [shape: bf16[384,16], index: 1, kind: input, shape index: {}]
  %s2 = inlined_call_operand.vmem [shape: bf16[32,64], index: 2, kind: input, shape index: {}]
  %s3 = inlined_call_operand.vmem [shape: f32[1,64], index: 3, kind: input, shape index: {}]
  %s4 = inlined_call_operand.vmem [shape: bf16[64,64], index: 4, kind: input, shape index: {}]
  %s5 = inlined_call_operand.vmem [shape: f32[1,64], index: 5, kind: input, shape index: {}]
  %s6 = inlined_call_operand.vmem [shape: f32[1,64], index: 6, kind: input, shape index: {}]
  %s7 = inlined_call_operand.<no memory space> [shape: f32[1,1], index: 7, kind: input, shape index: {}]
  %s8 = inlined_call_operand.vmem [shape: f32[384,1], index: 8, kind: output, shape index: {}]
  %s9 = sld [smem:[#allocation0]]
  $region65: #{tpu_custom_call.1} parent=0
    _
  %s11 = ssub.s32 1, %s9
  %s12 = scalar_select 0, %s11, %s9
  %v13 = vstv %s7
  %14 = vst [vmem:[#allocation2] sm:$0x1] %v13
  loop: start=0, step=1, limit=5
  $region2: #{tpu_custom_call.1} parent=0 // loop_pre_header
    _
  $region3: #{tpu_custom_call.1} parent=0 // loop_header
    %s16 = sphi 0, %s20
    %p17 = scmp.ge.s32.totalorder %s16, 5
    %s26 = sphi 0, %s28
    %s29 = sphi 0, %s26
    %s30 = sphi 0, %s29
    %s46 = sphi 0, %s30
    %s52 = sphi 0, %s54
    %s55 = sphi 0, %s52
    %s56 = sphi 0, %s55
    %s72 = sphi 0, %s56
    %s76 = sphi 0, %s76
    %s78 = sphi 0, %s76
    %s79 = sphi 0, %s78
    %s93 = sphi 0, %s79
    %s97 = sphi 0, %s97
    %s99 = sphi 0, %s97
    %s100 = sphi 0, %s99
    %s114 = sphi 0, %s100
    %s118 = sphi 0, %s118
    %s120 = sphi 0, %s118
    %s121 = sphi 0, %s120
    %s135 = sphi 0, %s121
    %s139 = sphi 0, %s139
    %s141 = sphi 0, %s139
    %s142 = sphi 0, %s141
    %s156 = sphi 0, %s142
    %s160 = sphi 0, %s160
    %s162 = sphi 0, %s160
    %s163 = sphi 0, %s162
    %s177 = sphi 0, %s163
    %s181 = sphi 0, %s181
    %s183 = sphi 0, %s181
    %s184 = sphi 0, %s183
    %s198 = sphi 0, %s184
    %s204 = sphi 0, %s206
    %s207 = sphi 0, %s204
    %s208 = sphi 0, %s207
    %s224 = sphi 0, %s208
  $region4: #{tpu_custom_call.1} parent=0 // loop_header_branch
    %19 = sbr.rel (%p17) target = $region8
  $region5: #{tpu_custom_call.1} parent=0 // loop_body
    %s21 = ssub.s32 %s16, 1
    %s22 = ssub.s32 %s16, 2
    %s23 = sadd.s32 %s16, 1
    %s24 = ssub.s32 %s16, %s23
    %p25 = scmp.eq.s32.totalorder %s24, 0
    %s27 = sadd.s32 %s26, 1
    %s28 = scalar_select %p25, %s26, %s27
    %p31 = pneg %p25
    %p32 = scmp.eq.s32.totalorder %s16, 2
    %p33 = por %p31, %p32
    %p34 = scmp.ne.s32.totalorder %s26, %s29
    %p35 = scmp.eq.s32.totalorder %s16, 0
    %p36 = por %p34, %p35
    %p37 = scmp.ne.s32.totalorder %s26, %s29
    %p38 = scmp.eq.s32.totalorder %s21, 2
    %p39 = por %p37, %p38
    %p40 = scmp.ne.s32.totalorder %s29, %s30
    %p41 = scmp.eq.s32.totalorder %s21, 0
    %p42 = por %p40, %p41
    %p43 = scmp.ne.s32.totalorder %s29, %s30
    %p44 = scmp.eq.s32.totalorder %s22, 2
    %p45 = por %p43, %p44
    %p47 = scmp.ne.s32.totalorder %s30, %s46
    %p48 = scmp.eq.s32.totalorder %s22, 0
    %p49 = por %p47, %p48
    %s50 = ssub.s32 %s16, %s23
    %p51 = scmp.eq.s32.totalorder %s50, 0
    %s53 = sadd.s32 %s52, 1
    %s54 = scalar_select %p51, %s52, %s53
    %p57 = pneg %p51
    %p58 = scmp.eq.s32.totalorder %s16, 2
    %p59 = por %p57, %p58
    %p60 = scmp.ne.s32.totalorder %s52, %s55
    %p61 = scmp.eq.s32.totalorder %s16, 0
    %p62 = por %p60, %p61
    %p63 = scmp.ne.s32.totalorder %s52, %s55
    %p64 = scmp.eq.s32.totalorder %s21, 2
    %p65 = por %p63, %p64
    %p66 = scmp.ne.s32.totalorder %s55, %s56
    %p67 = scmp.eq.s32.totalorder %s21, 0
    %p68 = por %p66, %p67
    %p69 = scmp.ne.s32.totalorder %s55, %s56
    %p70 = scmp.eq.s32.totalorder %s22, 2
    %p71 = por %p69, %p70
    %p73 = scmp.ne.s32.totalorder %s56, %s72
    %p74 = scmp.eq.s32.totalorder %s22, 0
    %p75 = por %p73, %p74
    %s77 = sadd.s32 %s76, 1
    %p80 = scmp.eq.s32.totalorder %s16, 2
    %p81 = scmp.ne.s32.totalorder %s76, %s78
    %p82 = scmp.eq.s32.totalorder %s16, 0
    %p83 = por %p81, %p82
    %p84 = scmp.ne.s32.totalorder %s76, %s78
    %p85 = scmp.eq.s32.totalorder %s21, 2
    %p86 = por %p84, %p85
    %p87 = scmp.ne.s32.totalorder %s78, %s79
    %p88 = scmp.eq.s32.totalorder %s21, 0
    %p89 = por %p87, %p88
    %p90 = scmp.ne.s32.totalorder %s78, %s79
    %p91 = scmp.eq.s32.totalorder %s22, 2
    %p92 = por %p90, %p91
    %p94 = scmp.ne.s32.totalorder %s79, %s93
    %p95 = scmp.eq.s32.totalorder %s22, 0
    %p96 = por %p94, %p95
    %s98 = sadd.s32 %s97, 1
    %p101 = scmp.eq.s32.totalorder %s16, 2
    %p102 = scmp.ne.s32.totalorder %s97, %s99
    %p103 = scmp.eq.s32.totalorder %s16, 0
    %p104 = por %p102, %p103
    %p105 = scmp.ne.s32.totalorder %s97, %s99
    %p106 = scmp.eq.s32.totalorder %s21, 2
    %p107 = por %p105, %p106
    %p108 = scmp.ne.s32.totalorder %s99, %s100
    %p109 = scmp.eq.s32.totalorder %s21, 0
    %p110 = por %p108, %p109
    %p111 = scmp.ne.s32.totalorder %s99, %s100
    %p112 = scmp.eq.s32.totalorder %s22, 2
    %p113 = por %p111, %p112
    %p115 = scmp.ne.s32.totalorder %s100, %s114
    %p116 = scmp.eq.s32.totalorder %s22, 0
    %p117 = por %p115, %p116
    %s119 = sadd.s32 %s118, 1
    %p122 = scmp.eq.s32.totalorder %s16, 2
    %p123 = scmp.ne.s32.totalorder %s118, %s120
    %p124 = scmp.eq.s32.totalorder %s16, 0
    %p125 = por %p123, %p124
    %p126 = scmp.ne.s32.totalorder %s118, %s120
    %p127 = scmp.eq.s32.totalorder %s21, 2
    %p128 = por %p126, %p127
    %p129 = scmp.ne.s32.totalorder %s120, %s121
    %p130 = scmp.eq.s32.totalorder %s21, 0
    %p131 = por %p129, %p130
    %p132 = scmp.ne.s32.totalorder %s120, %s121
    %p133 = scmp.eq.s32.totalorder %s22, 2
    %p134 = por %p132, %p133
    %p136 = scmp.ne.s32.totalorder %s121, %s135
    %p137 = scmp.eq.s32.totalorder %s22, 0
    %p138 = por %p136, %p137
    %s140 = sadd.s32 %s139, 1
    %p143 = scmp.eq.s32.totalorder %s16, 2
    %p144 = scmp.ne.s32.totalorder %s139, %s141
    %p145 = scmp.eq.s32.totalorder %s16, 0
    %p146 = por %p144, %p145
    %p147 = scmp.ne.s32.totalorder %s139, %s141
    %p148 = scmp.eq.s32.totalorder %s21, 2
    %p149 = por %p147, %p148
    %p150 = scmp.ne.s32.totalorder %s141, %s142
    %p151 = scmp.eq.s32.totalorder %s21, 0
    %p152 = por %p150, %p151
    %p153 = scmp.ne.s32.totalorder %s141, %s142
    %p154 = scmp.eq.s32.totalorder %s22, 2
    %p155 = por %p153, %p154
    %p157 = scmp.ne.s32.totalorder %s142, %s156
    %p158 = scmp.eq.s32.totalorder %s22, 0
    %p159 = por %p157, %p158
    %s161 = sadd.s32 %s160, 1
    %p164 = scmp.eq.s32.totalorder %s16, 2
    %p165 = scmp.ne.s32.totalorder %s160, %s162
    %p166 = scmp.eq.s32.totalorder %s16, 0
    %p167 = por %p165, %p166
    %p168 = scmp.ne.s32.totalorder %s160, %s162
    %p169 = scmp.eq.s32.totalorder %s21, 2
    %p170 = por %p168, %p169
    %p171 = scmp.ne.s32.totalorder %s162, %s163
    %p172 = scmp.eq.s32.totalorder %s21, 0
    %p173 = por %p171, %p172
    %p174 = scmp.ne.s32.totalorder %s162, %s163
    %p175 = scmp.eq.s32.totalorder %s22, 2
    %p176 = por %p174, %p175
    %p178 = scmp.ne.s32.totalorder %s163, %s177
    %p179 = scmp.eq.s32.totalorder %s22, 0
    %p180 = por %p178, %p179
    %s182 = sadd.s32 %s181, 1
    %p185 = scmp.eq.s32.totalorder %s16, 2
    %p186 = scmp.ne.s32.totalorder %s181, %s183
    %p187 = scmp.eq.s32.totalorder %s16, 0
    %p188 = por %p186, %p187
    %p189 = scmp.ne.s32.totalorder %s181, %s183
    %p190 = scmp.eq.s32.totalorder %s21, 2
    %p191 = por %p189, %p190
    %p192 = scmp.ne.s32.totalorder %s183, %s184
    %p193 = scmp.eq.s32.totalorder %s21, 0
    %p194 = por %p192, %p193
    %p195 = scmp.ne.s32.totalorder %s183, %s184
    %p196 = scmp.eq.s32.totalorder %s22, 2
    %p197 = por %p195, %p196
    %p199 = scmp.ne.s32.totalorder %s184, %s198
    %p200 = scmp.eq.s32.totalorder %s22, 0
    %p201 = por %p199, %p200
    %s202 = ssub.s32 %s16, %s23
    %p203 = scmp.eq.s32.totalorder %s202, 0
    %s205 = sadd.s32 %s204, 1
    %s206 = scalar_select %p203, %s204, %s205
    %p209 = pneg %p203
    %p210 = scmp.eq.s32.totalorder %s16, 2
    %p211 = por %p209, %p210
    %p212 = scmp.ne.s32.totalorder %s204, %s207
    %p213 = scmp.eq.s32.totalorder %s16, 0
    %p214 = por %p212, %p213
    %p215 = scmp.ne.s32.totalorder %s204, %s207
    %p216 = scmp.eq.s32.totalorder %s21, 2
    %p217 = por %p215, %p216
    %p218 = scmp.ne.s32.totalorder %s207, %s208
    %p219 = scmp.eq.s32.totalorder %s21, 0
    %p220 = por %p218, %p219
    %p221 = scmp.ne.s32.totalorder %s207, %s208
    %p222 = scmp.eq.s32.totalorder %s22, 2
    %p223 = por %p221, %p222
    %p225 = scmp.ne.s32.totalorder %s208, %s224
    %p226 = scmp.eq.s32.totalorder %s22, 0
    %p227 = por %p225, %p226
    %p228 = scmp.le.s32.totalorder 1, %s16
    %p229 = scmp.lt.s32.totalorder %s16, 4
    %p230 = pnand %p228, %p229
    %p231 = pneg %p230
    // Predicated region
    $region9: #{tpu_custom_call.1} parent=5 // pred_check
      _
    $region10: #{tpu_custom_call.1} parent=5 // pred_check_branch
      %233 = sbr.rel (%p230) target = $region12
    $region11: #{tpu_custom_call.1} parent=5 // pred_region
      %s234 = ssub.s32 %s16, 1
      // Predicated region
      $region13: #{tpu_custom_call.1} parent=11 // pred_check
        %p235 = pneg %p89
      $region14: #{tpu_custom_call.1} parent=11 // pred_check_branch
        %237 = sbr.rel (%p235) target = $region16
      $region15: #{tpu_custom_call.1} parent=11 // pred_region
        _
      $region16: #{tpu_custom_call.1} parent=11 // pred_fallthru
        _
      // Predicated region
      $region17: #{tpu_custom_call.1} parent=11 // pred_check
        %p238 = pneg %p110
      $region18: #{tpu_custom_call.1} parent=11 // pred_check_branch
        %240 = sbr.rel (%p238) target = $region20
      $region19: #{tpu_custom_call.1} parent=11 // pred_region
        _
      $region20: #{tpu_custom_call.1} parent=11 // pred_fallthru
        _
      // Predicated region
      $region21: #{tpu_custom_call.1} parent=11 // pred_check
        %p241 = pneg %p131
      $region22: #{tpu_custom_call.1} parent=11 // pred_check_branch
        %243 = sbr.rel (%p241) target = $region24
      $region23: #{tpu_custom_call.1} parent=11 // pred_region
        _
      $region24: #{tpu_custom_call.1} parent=11 // pred_fallthru
        _
      // Predicated region
      $region25: #{tpu_custom_call.1} parent=11 // pred_check
        %p244 = pneg %p152
      $region26: #{tpu_custom_call.1} parent=11 // pred_check_branch
        %246 = sbr.rel (%p244) target = $region28
      $region27: #{tpu_custom_call.1} parent=11 // pred_region
        _
      $region28: #{tpu_custom_call.1} parent=11 // pred_fallthru
        _
      // Predicated region
      $region29: #{tpu_custom_call.1} parent=11 // pred_check
        %p247 = pneg %p173
      $region30: #{tpu_custom_call.1} parent=11 // pred_check_branch
        %249 = sbr.rel (%p247) target = $region32
      $region31: #{tpu_custom_call.1} parent=11 // pred_region
        _
      $region32: #{tpu_custom_call.1} parent=11 // pred_fallthru
        _
      // Predicated region
      $region33: #{tpu_custom_call.1} parent=11 // pred_check
        %p250 = pneg %p194
      $region34: #{tpu_custom_call.1} parent=11 // pred_check_branch
        %252 = sbr.rel (%p250) target = $region36
      $region35: #{tpu_custom_call.1} parent=11 // pred_region
        _
      $region36: #{tpu_custom_call.1} parent=11 // pred_fallthru
        _
    $region12: #{tpu_custom_call.1} parent=5 // pred_fallthru
      _
    %p253 = scmp.lt.s32.totalorder %s16, 3
    // Predicated region
    $region37: #{tpu_custom_call.1} parent=5 // pred_check
      %p254 = pneg %p253
    $region38: #{tpu_custom_call.1} parent=5 // pred_check_branch
      %256 = sbr.rel (%p254) target = $region40
    $region39: #{tpu_custom_call.1} parent=5 // pred_region
      // Predicated region
      $region41: #{tpu_custom_call.1} parent=39 // pred_check
        %p257 = pneg %p36
      $region42: #{tpu_custom_call.1} parent=39 // pred_check_branch
        %259 = sbr.rel (%p257) target = $region44
      $region43: #{tpu_custom_call.1} parent=39 // pred_region
        %s260 = smul.u32 16, %s16
        %p261 = scmp.lt.s32.totalorder %s260, 47
        %s262 = scalar_select %p261, %s260, 47
        %s263 = smul.addr %s262, 4
        %s264 = scalar_lea.vmem %s0, %s263
        %s265 = smul.u32 16, %s16
      $region44: #{tpu_custom_call.1} parent=39 // pred_fallthru
        _
      // Predicated region
      $region45: #{tpu_custom_call.1} parent=39 // pred_check
        %p266 = pneg %p62
      $region46: #{tpu_custom_call.1} parent=39 // pred_check_branch
        %268 = sbr.rel (%p266) target = $region48
      $region47: #{tpu_custom_call.1} parent=39 // pred_region
        %s269 = smul.u32 16, %s16
        %p270 = scmp.lt.s32.totalorder %s269, 47
        %s271 = scalar_select %p270, %s269, 47
        %s272 = smul.addr %s271, 4
        %s273 = scalar_lea.vmem %s1, %s272
        %s274 = smul.u32 16, %s16
      $region48: #{tpu_custom_call.1} parent=39 // pred_fallthru
        _
    $region40: #{tpu_custom_call.1} parent=5 // pred_fallthru
      _
    %p275 = scmp.le.s32.totalorder 1, %s16
    %p276 = scmp.lt.s32.totalorder %s16, 4
    %p277 = pnand %p275, %p276
    %p278 = pneg %p277
    // Predicated region
    $region49: #{tpu_custom_call.1} parent=5 // pred_check
      _
    $region50: #{tpu_custom_call.1} parent=5 // pred_check_branch
      %280 = sbr.rel (%p277) target = $region52
    $region51: #{tpu_custom_call.1} parent=5 // pred_region
      %s281 = ssub.s32 %s16, 1
      %s282 = smul.u32 16, %s21
      %p283 = scmp.lt.s32.totalorder %s282, 47
      %s284 = scalar_select %p283, %s282, 47
      %s285 = smul.addr %s284, 4
      %s286 = scalar_lea.vmem %s0, %s285
      %p287 = pneg %p42
      %p288 = pneg %p39
      %s289 = smul.u32 16, %s21
      %p290 = scmp.lt.s32.totalorder %s289, 47
      %s291 = scalar_select %p290, %s289, 47
      %s292 = smul.addr %s291, 4
      %s293 = scalar_lea.vmem %s1, %s292
      %p294 = pneg %p68
      %p295 = pneg %p65
      %p296 = pneg %p89
      %p297 = pneg %p86
      %p298 = pneg %p110
      %p299 = pneg %p107
      %p300 = pneg %p131
      %p301 = pneg %p128
      %p302 = pneg %p152
      %p303 = pneg %p149
      %p304 = pneg %p173
      %p305 = pneg %p170
      %p306 = pneg %p194
      %p307 = pneg %p191
      %p308 = pneg %p220
      %p309 = pneg %p217
      %s310 = smul.u32 16, %s21
      %p311 = scmp.lt.s32.totalorder %s310, 47
      %s312 = scalar_select %p311, %s310, 47
      %s313 = smul.addr %s312, 8
      %s314 = scalar_lea.vmem %s8, %s313
      %s315 = smul.u32 16, %s21
      %p316 = scmp.lt.s32.totalorder %s315, 47
      %s317 = scalar_select %p316, %s315, 47
      %s318 = smul.addr %s317, 4
      %s319 = scalar_lea.vmem %s0, %s318
      %s320 = smul.u32 16, %s21
      %s321 = smul.u32 16, %s21
      %p322 = scmp.lt.s32.totalorder %s321, 47
      %s323 = scalar_select %p322, %s321, 47
      %s324 = smul.addr %s323, 4
      %s325 = scalar_lea.vmem %s1, %s324
      %s326 = smul.u32 16, %s21
      %s327 = smul.u32 16, %s21
      %p328 = scmp.lt.s32.totalorder %s327, 47
      %s329 = scalar_select %p328, %s327, 47
      %s330 = smul.addr %s329, 8
      %s331 = scalar_lea.vmem %s8, %s330
      %s332 = smul.u32 16, %s21
      %v334 = vld [vmem:[%s319] sm:$0xf]
      %v335 = vld [vmem:[%s319 + $0x4] sm:$0xf]
      %v336 = vld [vmem:[%s319 + $0x8] sm:$0xf]
      %v337 = vld [vmem:[%s319 + $0xc] sm:$0xf]
      %v338 = vld [vmem:[%s319 + $0x10] sm:$0xf]
      %v339 = vld [vmem:[%s319 + $0x14] sm:$0xf]
      %v340 = vld [vmem:[%s319 + $0x18] sm:$0xf]
      %v341 = vld [vmem:[%s319 + $0x1c] sm:$0xf]
      %v342 = vld [vmem:[%s319 + $0x20] sm:$0xf]
      %v343 = vld [vmem:[%s319 + $0x24] sm:$0xf]
      %v344 = vld [vmem:[%s319 + $0x28] sm:$0xf]
      %v345 = vld [vmem:[%s319 + $0x2c] sm:$0xf]
      %v346 = vld [vmem:[%s319 + $0x30] sm:$0xf]
      %v347 = vld [vmem:[%s319 + $0x34] sm:$0xf]
      %v348 = vld [vmem:[%s319 + $0x38] sm:$0xf]
      %v349 = vld [vmem:[%s319 + $0x3c] sm:$0xf]
      %v350 = vld [vmem:[%s325] sm:$0xf]
      %v351 = vld [vmem:[%s325 + $0x4] sm:$0xf]
      %v352 = vld [vmem:[%s325 + $0x8] sm:$0xf]
      %v353 = vld [vmem:[%s325 + $0xc] sm:$0xf]
      %v354 = vld [vmem:[%s325 + $0x10] sm:$0xf]
      %v355 = vld [vmem:[%s325 + $0x14] sm:$0xf]
      %v356 = vld [vmem:[%s325 + $0x18] sm:$0xf]
      %v357 = vld [vmem:[%s325 + $0x1c] sm:$0xf]
      %v358 = vld [vmem:[%s325 + $0x20] sm:$0xf]
      %v359 = vld [vmem:[%s325 + $0x24] sm:$0xf]
      %v360 = vld [vmem:[%s325 + $0x28] sm:$0xf]
      %v361 = vld [vmem:[%s325 + $0x2c] sm:$0xf]
      %v362 = vld [vmem:[%s325 + $0x30] sm:$0xf]
      %v363 = vld [vmem:[%s325 + $0x34] sm:$0xf]
      %v364 = vld [vmem:[%s325 + $0x38] sm:$0xf]
      %v365 = vld [vmem:[%s325 + $0x3c] sm:$0xf]
      %v382 = vunpack.c.l.b16 %v334
      %v383 = vunpack.c.l.b16 %v335
      %v384 = vunpack.c.l.b16 %v336
      %v385 = vunpack.c.l.b16 %v337
      %v386 = vunpack.c.l.b16 %v338
      %v387 = vunpack.c.l.b16 %v339
      %v388 = vunpack.c.l.b16 %v340
      %v389 = vunpack.c.l.b16 %v341
      %v390 = vunpack.c.l.b16 %v342
      %v391 = vunpack.c.l.b16 %v343
      %v392 = vunpack.c.l.b16 %v344
      %v393 = vunpack.c.l.b16 %v345
      %v394 = vunpack.c.l.b16 %v346
      %v395 = vunpack.c.l.b16 %v347
      %v396 = vunpack.c.l.b16 %v348
      %v397 = vunpack.c.l.b16 %v349
      %v398 = vpack.c.b16 %v383, %v382
      %v399 = vpack.c.b16 %v385, %v384
      %v400 = vpack.c.b16 %v387, %v386
      %v401 = vpack.c.b16 %v389, %v388
      %v402 = vpack.c.b16 %v391, %v390
      %v403 = vpack.c.b16 %v393, %v392
      %v404 = vpack.c.b16 %v395, %v394
      %v405 = vpack.c.b16 %v397, %v396
      %v422 = vunpack.c.l.b16 %v350
      %v423 = vunpack.c.l.b16 %v351
      %v424 = vunpack.c.l.b16 %v352
      %v425 = vunpack.c.l.b16 %v353
      %v426 = vunpack.c.l.b16 %v354
      %v427 = vunpack.c.l.b16 %v355
      %v428 = vunpack.c.l.b16 %v356
      %v429 = vunpack.c.l.b16 %v357
      %v430 = vunpack.c.l.b16 %v358
      %v431 = vunpack.c.l.b16 %v359
      %v432 = vunpack.c.l.b16 %v360
      %v433 = vunpack.c.l.b16 %v361
      %v434 = vunpack.c.l.b16 %v362
      %v435 = vunpack.c.l.b16 %v363
      %v436 = vunpack.c.l.b16 %v364
      %v437 = vunpack.c.l.b16 %v365
      %v438 = vpack.c.b16 %v423, %v422
      %v439 = vpack.c.b16 %v425, %v424
      %v440 = vpack.c.b16 %v427, %v426
      %v441 = vpack.c.b16 %v429, %v428
      %v442 = vpack.c.b16 %v431, %v430
      %v443 = vpack.c.b16 %v433, %v432
      %v444 = vpack.c.b16 %v435, %v434
      %v445 = vpack.c.b16 %v437, %v436
      %446 = vrot.lane.b32.xlu0 %v438, 16
      %v447 = vpop.permute.xlu0 %446
      %448 = vrot.lane.b32.xlu0 %v439, 16
      %v449 = vpop.permute.xlu0 %448
      %450 = vrot.lane.b32.xlu0 %v440, 16
      %v451 = vpop.permute.xlu0 %450
      %452 = vrot.lane.b32.xlu0 %v441, 16
      %v453 = vpop.permute.xlu0 %452
      %454 = vrot.lane.b32.xlu0 %v442, 16
      %v455 = vpop.permute.xlu0 %454
      %456 = vrot.lane.b32.xlu0 %v443, 16
      %v457 = vpop.permute.xlu0 %456
      %458 = vrot.lane.b32.xlu0 %v444, 16
      %v459 = vpop.permute.xlu0 %458
      %460 = vrot.lane.b32.xlu0 %v445, 16
      %v461 = vpop.permute.xlu0 %460
      %vm462 = vcmask 130048
      %v465 = vsel %vm462, %v398, %v447
      %v468 = vsel %vm462, %v399, %v449
      %v471 = vsel %vm462, %v400, %v451
      %v474 = vsel %vm462, %v401, %v453
      %v477 = vsel %vm462, %v402, %v455
      %v480 = vsel %vm462, %v403, %v457
      %v483 = vsel %vm462, %v404, %v459
      %v486 = vsel %vm462, %v405, %v461
      %v487 = vld [vmem:[%s2] sm:$0xf]
      %v488 = vld [vmem:[%s2 + $0x4] sm:$0xf]
      %v489 = vld [vmem:[%s2 + $0x8] sm:$0xf]
      %v490 = vld [vmem:[%s2 + $0xc] sm:$0xf]
      %v491 = vld [vmem:[%s3] sm:$0x1]
      %v493 = vperm.slane %v491, 0
      %v499 = vunpack.c.l.b16 %v487
      %v500 = vunpack.c.l.b16 %v488
      %v501 = vunpack.c.l.b16 %v489
      %v502 = vunpack.c.l.b16 %v490
      %v503 = vpack.c.b16 %v500, %v499
      %v504 = vpack.c.b16 %v502, %v501
      %vm507 = vcmask 261120
      %v508 = vsel %vm507, %v465, 0
      %v510 = vsel %vm507, %v468, 0
      %v512 = vsel %vm507, %v471, 0
      %v514 = vsel %vm507, %v474, 0
      %v516 = vsel %vm507, %v477, 0
      %v518 = vsel %vm507, %v480, 0
      %v520 = vsel %vm507, %v483, 0
      %v522 = vsel %vm507, %v486, 0
      %524 = vmatpush.bf16.msra.mxu0 0
      %525 = vmatpush.bf16.msra.mxu0 0
      %526 = vmatpush.bf16.msra.mxu0 0
      %527 = vmatpush.bf16.msra.mxu0 0
      %528 = vmatpush.bf16.msra.mxu0 0
      %529 = vmatpush.bf16.msra.mxu0 0
      %530 = vmatpush.bf16.msra.mxu0 %v504
      %531 = vmatpush.bf16.msra.mxu0 %v503
      %532 = vmatmul.bf16.gmra.mxu0 %v508
      %v533 = vpop.f32.mrf.mxu0
      %v534 = vadd.f32 %v493, %v533
      %v535 = vpop.f32.mrf.mxu0
      %v536 = vadd.f32 %v493, %v535
      %537 = vmatmul.bf16.gmra.mxu0 %v510
      %v538 = vpop.f32.mrf.mxu0
      %v539 = vadd.f32 %v493, %v538
      %v540 = vpop.f32.mrf.mxu0
      %v541 = vadd.f32 %v493, %v540
      %542 = vmatmul.bf16.gmra.mxu0 %v512
      %v543 = vpop.f32.mrf.mxu0
      %v544 = vadd.f32 %v493, %v543
      %v545 = vpop.f32.mrf.mxu0
      %v546 = vadd.f32 %v493, %v545
      %547 = vmatmul.bf16.gmra.mxu0 %v514
      %v548 = vpop.f32.mrf.mxu0
      %v549 = vadd.f32 %v493, %v548
      %v550 = vpop.f32.mrf.mxu0
      %v551 = vadd.f32 %v493, %v550
      %552 = vmatmul.bf16.gmra.mxu0 %v516
      %v553 = vpop.f32.mrf.mxu0
      %v554 = vadd.f32 %v493, %v553
      %v555 = vpop.f32.mrf.mxu0
      %v556 = vadd.f32 %v493, %v555
      %557 = vmatmul.bf16.gmra.mxu0 %v518
      %v558 = vpop.f32.mrf.mxu0
      %v559 = vadd.f32 %v493, %v558
      %v560 = vpop.f32.mrf.mxu0
      %v561 = vadd.f32 %v493, %v560
      %562 = vmatmul.bf16.gmra.mxu0 %v520
      %v563 = vpop.f32.mrf.mxu0
      %v564 = vadd.f32 %v493, %v563
      %v565 = vpop.f32.mrf.mxu0
      %v566 = vadd.f32 %v493, %v565
      %567 = vmatmul.bf16.gmra.mxu0 %v522
      %v568 = vpop.f32.mrf.mxu0
      %v569 = vadd.f32 %v493, %v568
      %v570 = vpop.f32.mrf.mxu0
      %v571 = vadd.f32 %v493, %v570
      %572 = vdwg.mxu0
      %v573 = vmul.f32 %v534, 0.2
      %v574 = vmul.f32 %v536, 0.2
      %v575 = vmul.f32 %v539, 0.2
      %v576 = vmul.f32 %v541, 0.2
      %v577 = vmul.f32 %v544, 0.2
      %v578 = vmul.f32 %v546, 0.2
      %v579 = vmul.f32 %v549, 0.2
      %v580 = vmul.f32 %v551, 0.2
      %v581 = vmul.f32 %v554, 0.2
      %v582 = vmul.f32 %v556, 0.2
      %v583 = vmul.f32 %v559, 0.2
      %v584 = vmul.f32 %v561, 0.2
      %v585 = vmul.f32 %v564, 0.2
      %v586 = vmul.f32 %v566, 0.2
      %v587 = vmul.f32 %v569, 0.2
      %v588 = vmul.f32 %v571, 0.2
      %v589 = vmax.f32 %v534, %v573
      %v590 = vmax.f32 %v536, %v574
      %v591 = vmax.f32 %v539, %v575
      %v592 = vmax.f32 %v541, %v576
      %v593 = vmax.f32 %v544, %v577
      %v594 = vmax.f32 %v546, %v578
      %v595 = vmax.f32 %v549, %v579
      %v596 = vmax.f32 %v551, %v580
      %v597 = vmax.f32 %v554, %v581
      %v598 = vmax.f32 %v556, %v582
      %v599 = vmax.f32 %v559, %v583
      %v600 = vmax.f32 %v561, %v584
      %v601 = vmax.f32 %v564, %v585
      %v602 = vmax.f32 %v566, %v586
      %v603 = vmax.f32 %v569, %v587
      %v604 = vmax.f32 %v571, %v588
      %v605 = vpack.c.bf16 %v590, %v589
      %v606 = vpack.c.bf16 %v592, %v591
      %v607 = vpack.c.bf16 %v594, %v593
      %v608 = vpack.c.bf16 %v596, %v595
      %v609 = vpack.c.bf16 %v598, %v597
      %v610 = vpack.c.bf16 %v600, %v599
      %v611 = vpack.c.bf16 %v602, %v601
      %v612 = vpack.c.bf16 %v604, %v603
      %v613 = vld [vmem:[%s4] sm:$0xf]
      %v614 = vld [vmem:[%s4 + $0x4] sm:$0xf]
      %v615 = vld [vmem:[%s4 + $0x8] sm:$0xf]
      %v616 = vld [vmem:[%s4 + $0xc] sm:$0xf]
      %v617 = vld [vmem:[%s4 + $0x10] sm:$0xf]
      %v618 = vld [vmem:[%s4 + $0x14] sm:$0xf]
      %v619 = vld [vmem:[%s4 + $0x18] sm:$0xf]
      %v620 = vld [vmem:[%s4 + $0x1c] sm:$0xf]
      %v621 = vld [vmem:[%s5] sm:$0x1]
      %v623 = vperm.slane %v621, 0
      %v633 = vunpack.c.l.b16 %v613
      %v634 = vunpack.c.l.b16 %v614
      %v635 = vunpack.c.l.b16 %v615
      %v636 = vunpack.c.l.b16 %v616
      %v637 = vunpack.c.l.b16 %v617
      %v638 = vunpack.c.l.b16 %v618
      %v639 = vunpack.c.l.b16 %v619
      %v640 = vunpack.c.l.b16 %v620
      %v641 = vpack.c.b16 %v634, %v633
      %v642 = vpack.c.b16 %v636, %v635
      %v643 = vpack.c.b16 %v638, %v637
      %v644 = vpack.c.b16 %v640, %v639
      %vm649 = vcmask 523264
      %v651 = vsel %vm649, %v605, 0
      %v654 = vsel %vm649, %v606, 0
      %v657 = vsel %vm649, %v607, 0
      %v660 = vsel %vm649, %v608, 0
      %v663 = vsel %vm649, %v609, 0
      %v666 = vsel %vm649, %v610, 0
      %v669 = vsel %vm649, %v611, 0
      %v672 = vsel %vm649, %v612, 0
      %674 = vmatpush.bf16.msra.mxu0 0
      %675 = vmatpush.bf16.msra.mxu0 0
      %676 = vmatpush.bf16.msra.mxu0 0
      %677 = vmatpush.bf16.msra.mxu0 0
      %678 = vmatpush.bf16.msra.mxu0 %v644
      %679 = vmatpush.bf16.msra.mxu0 %v643
      %680 = vmatpush.bf16.msra.mxu0 %v642
      %681 = vmatpush.bf16.msra.mxu0 %v641
      %682 = vmatmul.bf16.gmra.mxu0 %v651
      %v683 = vpop.f32.mrf.mxu0
      %v684 = vadd.f32 %v623, %v683
      %v685 = vpop.f32.mrf.mxu0
      %v686 = vadd.f32 %v623, %v685
      %687 = vmatmul.bf16.gmra.mxu0 %v654
      %v688 = vpop.f32.mrf.mxu0
      %v689 = vadd.f32 %v623, %v688
      %v690 = vpop.f32.mrf.mxu0
      %v691 = vadd.f32 %v623, %v690
      %692 = vmatmul.bf16.gmra.mxu0 %v657
      %v693 = vpop.f32.mrf.mxu0
      %v694 = vadd.f32 %v623, %v693
      %v695 = vpop.f32.mrf.mxu0
      %v696 = vadd.f32 %v623, %v695
      %697 = vmatmul.bf16.gmra.mxu0 %v660
      %v698 = vpop.f32.mrf.mxu0
      %v699 = vadd.f32 %v623, %v698
      %v700 = vpop.f32.mrf.mxu0
      %v701 = vadd.f32 %v623, %v700
      %702 = vmatmul.bf16.gmra.mxu0 %v663
      %v703 = vpop.f32.mrf.mxu0
      %v704 = vadd.f32 %v623, %v703
      %v705 = vpop.f32.mrf.mxu0
      %v706 = vadd.f32 %v623, %v705
      %707 = vmatmul.bf16.gmra.mxu0 %v666
      %v708 = vpop.f32.mrf.mxu0
      %v709 = vadd.f32 %v623, %v708
      %v710 = vpop.f32.mrf.mxu0
      %v711 = vadd.f32 %v623, %v710
      %712 = vmatmul.bf16.gmra.mxu0 %v669
      %v713 = vpop.f32.mrf.mxu0
      %v714 = vadd.f32 %v623, %v713
      %v715 = vpop.f32.mrf.mxu0
      %v716 = vadd.f32 %v623, %v715
      %717 = vmatmul.bf16.gmra.mxu0 %v672
      %v718 = vpop.f32.mrf.mxu0
      %v719 = vadd.f32 %v623, %v718
      %v720 = vpop.f32.mrf.mxu0
      %v721 = vadd.f32 %v623, %v720
      %722 = vdwg.mxu0
      %v723 = vmul.f32 %v684, 0.2
      %v724 = vmul.f32 %v686, 0.2
      %v725 = vmul.f32 %v689, 0.2
      %v726 = vmul.f32 %v691, 0.2
      %v727 = vmul.f32 %v694, 0.2
      %v728 = vmul.f32 %v696, 0.2
      %v729 = vmul.f32 %v699, 0.2
      %v730 = vmul.f32 %v701, 0.2
      %v731 = vmul.f32 %v704, 0.2
      %v732 = vmul.f32 %v706, 0.2
      %v733 = vmul.f32 %v709, 0.2
      %v734 = vmul.f32 %v711, 0.2
      %v735 = vmul.f32 %v714, 0.2
      %v736 = vmul.f32 %v716, 0.2
      %v737 = vmul.f32 %v719, 0.2
      %v738 = vmul.f32 %v721, 0.2
      %v739 = vmax.f32 %v684, %v723
      %v740 = vmax.f32 %v686, %v724
      %v741 = vmax.f32 %v689, %v725
      %v742 = vmax.f32 %v691, %v726
      %v743 = vmax.f32 %v694, %v727
      %v744 = vmax.f32 %v696, %v728
      %v745 = vmax.f32 %v699, %v729
      %v746 = vmax.f32 %v701, %v730
      %v747 = vmax.f32 %v704, %v731
      %v748 = vmax.f32 %v706, %v732
      %v749 = vmax.f32 %v709, %v733
      %v750 = vmax.f32 %v711, %v734
      %v751 = vmax.f32 %v714, %v735
      %v752 = vmax.f32 %v716, %v736
      %v753 = vmax.f32 %v719, %v737
      %v754 = vmax.f32 %v721, %v738
      %v755 = vld [vmem:[%s6] sm:$0x1]
      %v757 = vperm.slane %v755, 0
      %v759 = vmul.f32 %v739, %v757
      %v760 = vmul.f32 %v740, %v757
      %v761 = vmul.f32 %v741, %v757
      %v762 = vmul.f32 %v742, %v757
      %v763 = vmul.f32 %v743, %v757
      %v764 = vmul.f32 %v744, %v757
      %v765 = vmul.f32 %v745, %v757
      %v766 = vmul.f32 %v746, %v757
      %v767 = vmul.f32 %v747, %v757
      %v768 = vmul.f32 %v748, %v757
      %v769 = vmul.f32 %v749, %v757
      %v770 = vmul.f32 %v750, %v757
      %v771 = vmul.f32 %v751, %v757
      %v772 = vmul.f32 %v752, %v757
      %v773 = vmul.f32 %v753, %v757
      %v774 = vmul.f32 %v754, %v757
      %v775 = vsel %vm649, %v759, 0.0
      %776 = vadd.xlane.f32.xlu0 %v775
      %v777 = vpop.xlane.xlu0 %776
      %v778 = vsel %vm649, %v760, 0.0
      %779 = vadd.xlane.f32.xlu0 %v778
      %v780 = vpop.xlane.xlu0 %779
      %v781 = vsel %vm649, %v761, 0.0
      %782 = vadd.xlane.f32.xlu0 %v781
      %v783 = vpop.xlane.xlu0 %782
      %v784 = vsel %vm649, %v762, 0.0
      %785 = vadd.xlane.f32.xlu0 %v784
      %v786 = vpop.xlane.xlu0 %785
      %v787 = vsel %vm649, %v763, 0.0
      %788 = vadd.xlane.f32.xlu0 %v787
      %v789 = vpop.xlane.xlu0 %788
      %v790 = vsel %vm649, %v764, 0.0
      %791 = vadd.xlane.f32.xlu0 %v790
      %v792 = vpop.xlane.xlu0 %791
      %v793 = vsel %vm649, %v765, 0.0
      %794 = vadd.xlane.f32.xlu0 %v793
      %v795 = vpop.xlane.xlu0 %794
      %v796 = vsel %vm649, %v766, 0.0
      %797 = vadd.xlane.f32.xlu0 %v796
      %v798 = vpop.xlane.xlu0 %797
      %v799 = vsel %vm649, %v767, 0.0
      %800 = vadd.xlane.f32.xlu0 %v799
      %v801 = vpop.xlane.xlu0 %800
      %v802 = vsel %vm649, %v768, 0.0
      %803 = vadd.xlane.f32.xlu0 %v802
      %v804 = vpop.xlane.xlu0 %803
      %v805 = vsel %vm649, %v769, 0.0
      %806 = vadd.xlane.f32.xlu0 %v805
      %v807 = vpop.xlane.xlu0 %806
      %v808 = vsel %vm649, %v770, 0.0
      %809 = vadd.xlane.f32.xlu0 %v808
      %v810 = vpop.xlane.xlu0 %809
      %v811 = vsel %vm649, %v771, 0.0
      %812 = vadd.xlane.f32.xlu0 %v811
      %v813 = vpop.xlane.xlu0 %812
      %v814 = vsel %vm649, %v772, 0.0
      %815 = vadd.xlane.f32.xlu0 %v814
      %v816 = vpop.xlane.xlu0 %815
      %v817 = vsel %vm649, %v773, 0.0
      %818 = vadd.xlane.f32.xlu0 %v817
      %v819 = vpop.xlane.xlu0 %818
      %v820 = vsel %vm649, %v774, 0.0
      %821 = vadd.xlane.f32.xlu0 %v820
      %v822 = vpop.xlane.xlu0 %821
      %v823 = vld [vmem:[#allocation2] sm:$0x1]
      %v825 = vperm.slane %v823, 0
      %v827 = vadd.f32 %v777, %v825
      %v828 = vadd.f32 %v780, %v825
      %v829 = vadd.f32 %v783, %v825
      %v830 = vadd.f32 %v786, %v825
      %v831 = vadd.f32 %v789, %v825
      %v832 = vadd.f32 %v792, %v825
      %v833 = vadd.f32 %v795, %v825
      %v834 = vadd.f32 %v798, %v825
      %v835 = vadd.f32 %v801, %v825
      %v836 = vadd.f32 %v804, %v825
      %v837 = vadd.f32 %v807, %v825
      %v838 = vadd.f32 %v810, %v825
      %v839 = vadd.f32 %v813, %v825
      %v840 = vadd.f32 %v816, %v825
      %v841 = vadd.f32 %v819, %v825
      %v842 = vadd.f32 %v822, %v825
      %v843 = vmax.f32 %v827, -50.0
      %v844 = vmax.f32 %v828, -50.0
      %v845 = vmax.f32 %v829, -50.0
      %v846 = vmax.f32 %v830, -50.0
      %v847 = vmax.f32 %v831, -50.0
      %v848 = vmax.f32 %v832, -50.0
      %v849 = vmax.f32 %v833, -50.0
      %v850 = vmax.f32 %v834, -50.0
      %v851 = vmax.f32 %v835, -50.0
      %v852 = vmax.f32 %v836, -50.0
      %v853 = vmax.f32 %v837, -50.0
      %v854 = vmax.f32 %v838, -50.0
      %v855 = vmax.f32 %v839, -50.0
      %v856 = vmax.f32 %v840, -50.0
      %v857 = vmax.f32 %v841, -50.0
      %v858 = vmax.f32 %v842, -50.0
      %v859 = vmin.f32 %v843, 50.0
      %v860 = vmin.f32 %v844, 50.0
      %v861 = vmin.f32 %v845, 50.0
      %v862 = vmin.f32 %v846, 50.0
      %v863 = vmin.f32 %v847, 50.0
      %v864 = vmin.f32 %v848, 50.0
      %v865 = vmin.f32 %v849, 50.0
      %v866 = vmin.f32 %v850, 50.0
      %v867 = vmin.f32 %v851, 50.0
      %v868 = vmin.f32 %v852, 50.0
      %v869 = vmin.f32 %v853, 50.0
      %v870 = vmin.f32 %v854, 50.0
      %v871 = vmin.f32 %v855, 50.0
      %v872 = vmin.f32 %v856, 50.0
      %v873 = vmin.f32 %v857, 50.0
      %v874 = vmin.f32 %v858, 50.0
      %vm875 = vcmask 7168
      %876 = vst.msk [vmem:[%s331] sm:$0xff] %vm875, %v859
      %877 = vst.msk [vmem:[%s331 + $0x8] sm:$0xff] %vm875, %v860
      %878 = vst.msk [vmem:[%s331 + $0x10] sm:$0xff] %vm875, %v861
      %879 = vst.msk [vmem:[%s331 + $0x18] sm:$0xff] %vm875, %v862
      %880 = vst.msk [vmem:[%s331 + $0x20] sm:$0xff] %vm875, %v863
      %881 = vst.msk [vmem:[%s331 + $0x28] sm:$0xff] %vm875, %v864
      %882 = vst.msk [vmem:[%s331 + $0x30] sm:$0xff] %vm875, %v865
      %883 = vst.msk [vmem:[%s331 + $0x38] sm:$0xff] %vm875, %v866
      %884 = vst.msk [vmem:[%s331 + $0x40] sm:$0xff] %vm875, %v867
      %885 = vst.msk [vmem:[%s331 + $0x48] sm:$0xff] %vm875, %v868
      %886 = vst.msk [vmem:[%s331 + $0x50] sm:$0xff] %vm875, %v869
      %887 = vst.msk [vmem:[%s331 + $0x58] sm:$0xff] %vm875, %v870
      %888 = vst.msk [vmem:[%s331 + $0x60] sm:$0xff] %vm875, %v871
      %889 = vst.msk [vmem:[%s331 + $0x68] sm:$0xff] %vm875, %v872
      %890 = vst.msk [vmem:[%s331 + $0x70] sm:$0xff] %vm875, %v873
      %891 = vst.msk [vmem:[%s331 + $0x78] sm:$0xff] %vm875, %v874
      %s892 = smul.u32 16, %s21
      %p893 = scmp.lt.s32.totalorder %s892, 47
      %s894 = scalar_select %p893, %s892, 47
      %s895 = smul.addr %s894, 8
      %s896 = scalar_lea.vmem %s8, %s895
      // Predicated region
      $region53: #{tpu_custom_call.1} parent=51 // pred_check
        %p897 = pneg %p217
      $region54: #{tpu_custom_call.1} parent=51 // pred_check_branch
        %899 = sbr.rel (%p897) target = $region56
      $region55: #{tpu_custom_call.1} parent=51 // pred_region
        %s900 = smul.u32 16, %s21
      $region56: #{tpu_custom_call.1} parent=51 // pred_fallthru
        _
    $region52: #{tpu_custom_call.1} parent=5 // pred_fallthru
      _
    %p901 = scmp.le.s32.totalorder 2, %s16
    // Predicated region
    $region57: #{tpu_custom_call.1} parent=5 // pred_check
      %p902 = pneg %p901
    $region58: #{tpu_custom_call.1} parent=5 // pred_check_branch
      %904 = sbr.rel (%p902) target = $region60
    $region59: #{tpu_custom_call.1} parent=5 // pred_region
      %s905 = ssub.s32 %s16, 2
      // Predicated region
      $region61: #{tpu_custom_call.1} parent=59 // pred_check
        %p906 = pneg %p223
      $region62: #{tpu_custom_call.1} parent=59 // pred_check_branch
        %908 = sbr.rel (%p906) target = $region64
      $region63: #{tpu_custom_call.1} parent=59 // pred_region
        %s909 = smul.u32 16, %s22
        %p910 = scmp.lt.s32.totalorder %s909, 47
        %s911 = scalar_select %p910, %s909, 47
        %s912 = smul.addr %s911, 8
        %s913 = scalar_lea.vmem %s8, %s912
      $region64: #{tpu_custom_call.1} parent=59 // pred_fallthru
        _
    $region60: #{tpu_custom_call.1} parent=5 // pred_fallthru
      _
  $region6: #{tpu_custom_call.1} parent=0 // loop_footer
    %s20 = sadd.s32 1, %s16
  $region7: #{tpu_custom_call.1} parent=0 // loop_footer_branch
    %15 = sbr.rel target = $region3
  $region8: #{tpu_custom_call.1} parent=0 // loop_exit
    _

</llo_original>
